<compile_context>
chip_gen: v7x
topology: tpu7x:2x2x1
jax: 0.10.0
libtpu: 0.0.40
codegen_flags: <defaults>
</compile_context>

<pallas_src>
import functools

import jax
import jax.numpy as jnp
from jax.experimental import pallas as pl
from jax.experimental.pallas import tpu as pltpu


# ----------------------- quantization glue (mirrors the module __init__) -----
class QuantConfig:
    """Symmetric quantization config (used for scales and the reference table)."""

    def __init__(self, bit: int, narrow: bool, unsign: bool, amax: float):
        self.bit = bit
        self.narrow = narrow
        self.unsign = unsign
        if unsign:
            self.quant_min, self.quant_max = 0, 2 ** bit - 1
        else:
            self.quant_min = -(2 ** (bit - 1)) + (1 if narrow else 0)
            self.quant_max = 2 ** (bit - 1) - 1
        self.amax = float(amax)
        self.scale = self.amax / self.quant_max
        self.dtype = jnp.int8 if bit <= 8 else jnp.int16

    def dequantize(self, q):
        return q.astype(jnp.float32) * self.scale

    def quantize(self, x):
        q = jnp.round(x / self.scale)
        return jnp.clip(q, self.quant_min, self.quant_max).astype(self.dtype)


# --------------------------------- Pallas kernel ------------------------------
def _tanh_quant_kernel(x_ref, o_ref, *, scale_in, inv_scale_out, qmin, qmax,
                       apply_clip, chunk_rows, n_chunks):
    """int8 codes -> dequantize -> tanh (EUP) -> requantize -> int codes.

    The block is processed in `n_chunks` row-chunks of `chunk_rows` so the f32
    intermediates never exceed ~1 MiB each, independent of the (large) block size.
    """

    def run(xs):
        xf = xs.astype(jnp.float32)                     # DQ_in happens via * scale_in
        y = jnp.tanh(xf * scale_in) * inv_scale_out     # tanh on the EUP slot
        q = jnp.round(y)                                # RNE round == torch.round
        if apply_clip:                                  # only when a user output_amax
            q = jnp.clip(q, qmin, qmax)                 # could push codes out of range
        return q.astype(o_ref.dtype)

    if n_chunks == 1:
        o_ref[...] = run(x_ref[...])
    else:
        @pl.loop(0, n_chunks)
        def _(c):
            r0 = pl.multiple_of(c * chunk_rows, chunk_rows)
            o_ref[pl.ds(r0, chunk_rows), :] = run(x_ref[pl.ds(r0, chunk_rows), :])


def _tanh_forward_2d(x2d, *, scale_in, inv_scale_out, qmin, qmax, apply_clip,
                     out_dtype, target_block_bytes, chunk_bytes, vmem_limit_bytes):
    """Run the kernel on a lane-dense (rows, lane_w) int8 slab."""
    rows, lane_w = x2d.shape
    total = rows * lane_w
    out_itemsize = jnp.dtype(out_dtype).itemsize

    # In-kernel chunk: ~chunk_bytes of int8, rows a multiple of 32 (int8 (32,128) tile).
    chunk_rows = max(32, ((chunk_bytes // lane_w) // 32) * 32)

    if rows <= chunk_rows:
        # Small array (<= ~256 KiB): one block, one chunk (block == full array is legal).
        block_rows, chunk_rows, n_chunks = rows, rows, 1
    else:
        # ~target_block_bytes of int8 per grid step, but keep >= 4 grid steps so the
        # row axis can be sharded across both v7x TensorCores and the DMA pipeline
        # has iterations to overlap.
        n_chunks = max(1, target_block_bytes // (chunk_rows * lane_w))
        while n_chunks > 1 and pl.cdiv(rows, chunk_rows * n_chunks) < 4:
            n_chunks -= 1
        block_rows = chunk_rows * n_chunks     # multiple of 32 by construction

    grid = (pl.cdiv(rows, block_rows),)        # ragged final block is masked by Pallas

    kernel = functools.partial(
        _tanh_quant_kernel,
        scale_in=float(scale_in), inv_scale_out=float(inv_scale_out),
        qmin=float(qmin), qmax=float(qmax),
        apply_clip=bool(apply_clip), chunk_rows=chunk_rows, n_chunks=n_chunks)

    return pl.pallas_call(
        kernel,
        out_shape=jax.ShapeDtypeStruct((rows, lane_w), out_dtype),
        grid=grid,
        in_specs=[pl.BlockSpec((block_rows, lane_w), lambda i: (i, 0))],
        out_specs=pl.BlockSpec((block_rows, lane_w), lambda i: (i, 0)),
        compiler_params=pltpu.CompilerParams(
            dimension_semantics=("parallel",),          # shard rows across TCs (v7x)
            vmem_limit_bytes=vmem_limit_bytes),         # explicit budget, v7x-safe
        cost_estimate=pl.CostEstimate(
            flops=(7 if apply_clip else 5) * total,
            transcendentals=total,
            bytes_accessed=total * (1 + out_itemsize)),
    )(x2d)


def _tanh_half_table_forward(x, *, scale_in, inv_scale_out, qmin, qmax, apply_clip,
                             out_dtype=jnp.int8,
                             target_block_bytes=2 * 1024 * 1024,
                             chunk_bytes=256 * 1024,
                             vmem_limit_bytes=48 * 1024 * 1024):
    """Elementwise quantized tanh; int8 in / int8 (or int16) out at the HBM boundary."""
    orig_shape = x.shape
    flat = x.reshape(-1)                     # stays int8, no widening pass
    total = flat.shape[0]
    if total == 0:
        return jnp.zeros(orig_shape, out_dtype)

    common = dict(scale_in=scale_in, inv_scale_out=inv_scale_out, qmin=qmin, qmax=qmax,
                  apply_clip=apply_clip, out_dtype=out_dtype,
                  target_block_bytes=target_block_bytes, chunk_bytes=chunk_bytes,
                  vmem_limit_bytes=vmem_limit_bytes)

    # Lane-dense slab: widest trailing dim (multiple of 128) that divides the flat size.
    for cand in (2048, 1024, 512, 256, 128):
        if total % cand == 0:
            out2d = _tanh_forward_2d(flat.reshape(total // cand, cand), **common)
            return out2d.reshape(orig_shape)

    # Ragged tail (< 128 trailing elements): kernel handles the 128-aligned bulk, the
    # tiny tail is computed with the same formula in plain JAX.  This avoids the
    # previous full-array jnp.pad + full-array slice round trips.
    # TODO(synk): a fully copy-free ragged path would need a masked-store final block.
    lane_w = 128
    bulk = (total // lane_w) * lane_w
    pieces = []
    if bulk:
        out_bulk = _tanh_forward_2d(flat[:bulk].reshape(bulk // lane_w, lane_w), **common)
        pieces.append(out_bulk.reshape(-1))
    tail = flat[bulk:]
    y_tail = jnp.round(jnp.tanh(tail.astype(jnp.float32) * scale_in) * inv_scale_out)
    y_tail = jnp.clip(y_tail, qmin, qmax)     # tail is < 128 elements; clip is free
    pieces.append(y_tail.astype(out_dtype))
    return jnp.concatenate(pieces).reshape(orig_shape)


# ------------------------------- module wrapper -------------------------------
class TanHHalfTable:
    """JAX/Pallas port of the quantized TanHHalfTable module."""

    def __init__(self, input_bit, input_amax, input_unsign, output_bit, output_amax=None):
        assert input_bit <= 8
        narrow = True
        self.input_qconfig = QuantConfig(input_bit, narrow, input_unsign, input_amax)
        input_quant_pos = jnp.arange(0, self.input_qconfig.quant_max + 1, dtype=jnp.int32)
        output_float_pos = jnp.tanh(self.input_qconfig.dequantize(input_quant_pos))
        amax_out = float(output_amax) if output_amax else float(jnp.max(jnp.abs(output_float_pos)))
        self.output_qconfig = QuantConfig(output_bit, narrow, False, amax_out)
        # Precomputed half-table (kept for the reference check; the kernel evaluates
        # the identical function directly on the EUP).
        self._table = self.output_qconfig.quantize(output_float_pos)
        # With the default output_amax == max|tanh(DQ_in(q))| the requantized value is
        # <= qmax by construction, so the in-kernel clip is provably redundant and we
        # skip it (saves 2 VALU ops/elem).  A user-supplied output_amax needs the clip.
        self._apply_clip = bool(output_amax)

    def __call__(self, x):
        return _tanh_half_table_forward(
            x,
            scale_in=self.input_qconfig.scale,
            inv_scale_out=1.0 / self.output_qconfig.scale,
            qmin=self.output_qconfig.quant_min,
            qmax=self.output_qconfig.quant_max,
            apply_clip=self._apply_clip,
            out_dtype=self.output_qconfig.dtype)

    def reference(self, x):
        """Plain-JAX mirror of the PyTorch forward: y = sign(x) * table[|x|]."""
        absx = jnp.abs(x.astype(jnp.int32))
        t = self._table[absx]
        return jnp.where(x >= 0, t, -t).astype(self.output_qconfig.dtype)


# ------------------------------------ demo ------------------------------------
if __name__ == "__main__":
    mod = TanHHalfTable(input_bit=8, input_amax=4.0, input_unsign=False, output_bit=8)

    key_small, key_big = jax.random.split(jax.random.PRNGKey(0))

    def check(x, min_exact):
        y = jax.block_until_ready(mod(x))
        ref = mod.reference(x)
        assert y.shape == x.shape and y.dtype == mod.output_qconfig.dtype
        diff = jnp.abs(y.astype(jnp.int32) - ref.astype(jnp.int32))
        # The in-kernel EUP tanh may differ by ~1 ULP from the XLA tanh used to build
        # the reference table; that can flip a code only on an exact round-half-even
        # boundary, so allow at most off-by-one codes and require near-total equality.
        assert int(jnp.max(diff)) <= 1
        assert float(jnp.mean((diff == 0).astype(jnp.float32))) >= min_exact

    # Small NCHW tensor consistent with the module (single-block path).
    x_small = jax.random.randint(key_small, (2, 4, 16, 16), -127, 128,
                                 dtype=jnp.int32).astype(jnp.int8)
    check(x_small, 0.99)

    # Mid-size tensor: exercises the multi-step grid and the in-kernel chunk loop.
    x_big = jax.random.randint(key_big, (4, 8, 256, 256), -127, 128,
                               dtype=jnp.int32).astype(jnp.int8)
    check(x_big, 0.985)

    print("KERNEL_OK")
</pallas_src>

<mosaic_0001>
module attributes {stable_mosaic.version = 11 : i64} {
  func.func @_tanh_quant_kernel(%arg0: i32, %arg1: memref<1x2048xi8, #tpu.memory_space<vmem>>, %arg2: memref<1x2048xi8, #tpu.memory_space<vmem>>) attributes {dimension_semantics = [#tpu.dimension_semantics<parallel>], iteration_bounds = array<i64: 1>, scalar_prefetch = 0 : i64, scratch_operands = 0 : i64, tpu.core_type = #tpu.core_type<tc>, window_params = [{transform_indices = @transform_0, window_bounds = array<i64: 1, 2048>}, {transform_indices = @transform_1, window_bounds = array<i64: 1, 2048>}]} {
    %c0 = arith.constant 0 : index
    %c0_0 = arith.constant 0 : index
    %0 = vector.load %arg1[%c0, %c0_0] : memref<1x2048xi8, #tpu.memory_space<vmem>>, vector<1x2048xi8>
    %1 = arith.sitofp %0 : vector<1x2048xi8> to vector<1x2048xf32>
    %cst = arith.constant 0.0314960629 : f32
    %2 = vector.broadcast %cst : f32 to vector<1x2048xf32>
    %3 = arith.mulf %1, %2 : vector<1x2048xf32>
    %4 = math.tanh %3 : vector<1x2048xf32>
    %cst_1 = arith.constant 127.085251 : f32
    %5 = vector.broadcast %cst_1 : f32 to vector<1x2048xf32>
    %6 = arith.mulf %4, %5 : vector<1x2048xf32>
    %7 = math.roundeven %6 : vector<1x2048xf32>
    %8 = arith.fptosi %7 : vector<1x2048xf32> to vector<1x2048xi8>
    %c0_2 = arith.constant 0 : index
    %c0_3 = arith.constant 0 : index
    %9 = vector.load %arg2[%c0_2, %c0_3] : memref<1x2048xi8, #tpu.memory_space<vmem>>, vector<1x2048xi8>
    tpu.vector_store %arg2[%c0_2, %c0_3], %8 {strides = array<i32>} : memref<1x2048xi8, #tpu.memory_space<vmem>>, vector<1x2048xi8>,
    return
  }
  func.func @transform_0(%arg0: i32) -> (i32, i32) {
    %c0_i32 = arith.constant 0 : i32
    %c0_i32_0 = arith.constant 0 : i32
    return %arg0, %c0_i32 : i32, i32
  }
  func.func @transform_1(%arg0: i32) -> (i32, i32) {
    %c0_i32 = arith.constant 0 : i32
    %c0_i32_0 = arith.constant 0 : i32
    return %arg0, %c0_i32 : i32, i32
  }
}

</mosaic_0001>

<llo_original>
// kernel: tpu_custom_call.1
$region0: #{tpu_custom_call.1}
  #allocation0 [shape = 'u32[]', space=smem, size = 0x4, offset = 0x4, fixed_abs, tag = 'smem constant byte address 0x4 - core index']
  #allocation1 [shape = 'u32[144,128]{1,0:T(1,128)}', space=vmem, size = 0x12000, scoped, tag = 'internal scratch']
  %s0 = inlined_call_operand.hbm [shape: s8[1,2048], index: 0, kind: input, shape index: {}]
  %s1 = inlined_call_operand.hbm [shape: s8[1,2048], index: 1, kind: output, shape index: {}]
  %s2 = sld [smem:[#allocation0]]
  $region18: #{tpu_custom_call.1} parent=0
    _
  %s4 = ssub.s32 1, %s2
  %s5 = scalar_select 0, %s4, %s2
  $region1: #{tpu_custom_call.1} parent=0
    #allocation2 [shape = 'u8[8192]{0}', space=vmem, size = 0x2000, scoped, tag = 'input window, operand 0, single buffered']
    #allocation3 [shape = 's32[1]{0}', space=sflag, size = 0x4, scoped, tag = 'scoped memory for tpu_custom_call.1']
    #allocation4 [shape = 's32[1]{0}', space=sflag, size = 0x4, scoped, tag = 'scoped memory for tpu_custom_call.1']
    #allocation5 [shape = 'u8[8192]{0}', space=vmem, size = 0x2000, scoped, tag = 'output window, operand 0, single buffered']
    %6 = vsyncpa [#allocation3], 0
    %7 = vsyncpa [#allocation4], 0
    // Predicated region
    $region2: #{tpu_custom_call.1} parent=1 // pred_check
      _
    $region3: #{tpu_custom_call.1} parent=1 // pred_check_branch
      %9 = sbr.rel (0) target = $region5
    $region4: #{tpu_custom_call.1} parent=1 // pred_region
      %s11 = ssub.s32 256, 256
      %12 = vsyncadd [#allocation3], %s11
      %s14 = sshll.u32 [#allocation2], 4
      %s15 = int_to_ptr.vmem [resolvable:$true] %s14
      %17 = dma.hbm_to_vmem [thread:$0]  %s0, 256, %s15, [#allocation3]
    $region5: #{tpu_custom_call.1} parent=1 // pred_fallthru
      _
    // Predicated region
    $region6: #{tpu_custom_call.1} parent=1 // pred_check
      _
    $region7: #{tpu_custom_call.1} parent=1 // pred_check_branch
      %19 = sbr.rel (0) target = $region9
    $region8: #{tpu_custom_call.1} parent=1 // pred_region
      %20 = dma.done [#allocation3], 256
    $region9: #{tpu_custom_call.1} parent=1 // pred_fallthru
      _
    %v21 = vld [vmem:[#allocation2] sm:$0xff]
    %v22 = vld [vmem:[#allocation2 + $0x8] sm:$0xff]
    %v23 = vunpack.c.0.s8 %v21
    %v24 = vunpack.c.1.s8 %v21
    %v25 = vunpack.c.2.s8 %v21
    %v26 = vunpack.c.3.s8 %v21
    %v27 = vunpack.c.0.s8 %v22
    %v28 = vunpack.c.1.s8 %v22
    %v29 = vunpack.c.2.s8 %v22
    %v30 = vunpack.c.3.s8 %v22
    %v31 = vcvt.s32.f32 %v23
    %v32 = vcvt.s32.f32 %v24
    %v33 = vcvt.s32.f32 %v25
    %v34 = vcvt.s32.f32 %v26
    %v35 = vcvt.s32.f32 %v27
    %v36 = vcvt.s32.f32 %v28
    %v37 = vcvt.s32.f32 %v29
    %v38 = vcvt.s32.f32 %v30
    %v39 = vmul.f32 %v31, 0.031496063
    %v40 = vmul.f32 %v32, 0.031496063
    %v41 = vmul.f32 %v33, 0.031496063
    %v42 = vmul.f32 %v34, 0.031496063
    %v43 = vmul.f32 %v35, 0.031496063
    %v44 = vmul.f32 %v36, 0.031496063
    %v45 = vmul.f32 %v37, 0.031496063
    %v46 = vmul.f32 %v38, 0.031496063
    %v47 = vtanh.pop %v39
    %v48 = vtanh.pop %v40
    %v49 = vtanh.pop %v41
    %v50 = vtanh.pop %v42
    %v51 = vtanh.pop %v43
    %v52 = vtanh.pop %v44
    %v53 = vtanh.pop %v45
    %v54 = vtanh.pop %v46
    %v55 = vmul.f32 %v47, 127.08525
    %v56 = vmul.f32 %v48, 127.08525
    %v57 = vmul.f32 %v49, 127.08525
    %v58 = vmul.f32 %v50, 127.08525
    %v59 = vmul.f32 %v51, 127.08525
    %v60 = vmul.f32 %v52, 127.08525
    %v61 = vmul.f32 %v53, 127.08525
    %v62 = vmul.f32 %v54, 127.08525
    %v71 = vlaneseq
    %v72 = vshrl.u32 %v71, 7
    %v73 = vsub.s32 0, %v72
    %v74 = vrot.slane %v55, %v73
    %v75 = vlaneseq
    %v76 = vshrl.u32 %v75, 7
    %v77 = vsub.s32 4, %v76
    %v78 = vrot.slane %v55, %v77
    %v79 = vlaneseq
    %v80 = vshrl.u32 %v79, 7
    %v81 = vsub.s32 0, %v80
    %v82 = vrot.slane %v56, %v81
    %v83 = vlaneseq
    %v84 = vshrl.u32 %v83, 7
    %v85 = vsub.s32 4, %v84
    %v86 = vrot.slane %v56, %v85
    %v87 = vlaneseq
    %v88 = vshrl.u32 %v87, 7
    %v89 = vsub.s32 0, %v88
    %v90 = vrot.slane %v57, %v89
    %v91 = vlaneseq
    %v92 = vshrl.u32 %v91, 7
    %v93 = vsub.s32 4, %v92
    %v94 = vrot.slane %v57, %v93
    %v95 = vlaneseq
    %v96 = vshrl.u32 %v95, 7
    %v97 = vsub.s32 0, %v96
    %v98 = vrot.slane %v58, %v97
    %v99 = vlaneseq
    %v100 = vshrl.u32 %v99, 7
    %v101 = vsub.s32 4, %v100
    %v102 = vrot.slane %v58, %v101
    %v103 = vlaneseq
    %v104 = vshrl.u32 %v103, 7
    %v105 = vsub.s32 0, %v104
    %v106 = vrot.slane %v59, %v105
    %v107 = vlaneseq
    %v108 = vshrl.u32 %v107, 7
    %v109 = vsub.s32 4, %v108
    %v110 = vrot.slane %v59, %v109
    %v111 = vlaneseq
    %v112 = vshrl.u32 %v111, 7
    %v113 = vsub.s32 0, %v112
    %v114 = vrot.slane %v60, %v113
    %v115 = vlaneseq
    %v116 = vshrl.u32 %v115, 7
    %v117 = vsub.s32 4, %v116
    %v118 = vrot.slane %v60, %v117
    %v119 = vlaneseq
    %v120 = vshrl.u32 %v119, 7
    %v121 = vsub.s32 0, %v120
    %v122 = vrot.slane %v61, %v121
    %v123 = vlaneseq
    %v124 = vshrl.u32 %v123, 7
    %v125 = vsub.s32 4, %v124
    %v126 = vrot.slane %v61, %v125
    %v127 = vlaneseq
    %v128 = vshrl.u32 %v127, 7
    %v129 = vsub.s32 0, %v128
    %v130 = vrot.slane %v62, %v129
    %v131 = vlaneseq
    %v132 = vshrl.u32 %v131, 7
    %v133 = vsub.s32 4, %v132
    %v134 = vrot.slane %v62, %v133
    %v151 = vpack.c.f32.eXmY %v74, %v74, 312
    %v155 = vpack.c.b8 %v151, %v151
    %v157 = vpack.c.f32.eXmY %v78, %v78, 312
    %v161 = vpack.c.b8 %v157, %v157
    %v163 = vpack.c.f32.eXmY %v82, %v82, 312
    %v167 = vpack.c.b8 %v163, %v163
    %v169 = vpack.c.f32.eXmY %v86, %v86, 312
    %v173 = vpack.c.b8 %v169, %v169
    %v175 = vpack.c.f32.eXmY %v90, %v90, 312
    %v179 = vpack.c.b8 %v175, %v175
    %v181 = vpack.c.f32.eXmY %v94, %v94, 312
    %v185 = vpack.c.b8 %v181, %v181
    %v187 = vpack.c.f32.eXmY %v98, %v98, 312
    %v191 = vpack.c.b8 %v187, %v187
    %v193 = vpack.c.f32.eXmY %v102, %v102, 312
    %v197 = vpack.c.b8 %v193, %v193
    %v199 = vpack.c.f32.eXmY %v106, %v106, 312
    %v203 = vpack.c.b8 %v199, %v199
    %v205 = vpack.c.f32.eXmY %v110, %v110, 312
    %v209 = vpack.c.b8 %v205, %v205
    %v211 = vpack.c.f32.eXmY %v114, %v114, 312
    %v215 = vpack.c.b8 %v211, %v211
    %v217 = vpack.c.f32.eXmY %v118, %v118, 312
    %v221 = vpack.c.b8 %v217, %v217
    %v223 = vpack.c.f32.eXmY %v122, %v122, 312
    %v227 = vpack.c.b8 %v223, %v223
    %v229 = vpack.c.f32.eXmY %v126, %v126, 312
    %v233 = vpack.c.b8 %v229, %v229
    %v235 = vpack.c.f32.eXmY %v130, %v130, 312
    %v239 = vpack.c.b8 %v235, %v235
    %v241 = vpack.c.f32.eXmY %v134, %v134, 312
    %v245 = vpack.c.b8 %v241, %v241
    %v247 = vcombine.low %v155, %v161
    %v248 = vcombine.low %v167, %v173
    %v249 = vcombine.low %v179, %v185
    %v250 = vcombine.low %v191, %v197
    %v252 = vunpack.c.l.s4 1966171168
    %v253 = vunpack.c.0.s8 %v252
    %v254 = vlaneseq
    %v255 = vshrl.u32 %v254, 7
    %v256 = vsub.s32 %v253, %v255
    %v257 = vrot.slane %v247, %v256
    %v259 = vunpack.c.l.s4 1966171168
    %v260 = vunpack.c.0.s8 %v259
    %v261 = vlaneseq
    %v262 = vshrl.u32 %v261, 7
    %v263 = vsub.s32 %v260, %v262
    %v264 = vrot.slane %v248, %v263
    %v266 = vunpack.c.l.s4 1966171168
    %v267 = vunpack.c.0.s8 %v266
    %v268 = vlaneseq
    %v269 = vshrl.u32 %v268, 7
    %v270 = vsub.s32 %v267, %v269
    %v271 = vrot.slane %v249, %v270
    %v273 = vunpack.c.l.s4 1966171168
    %v274 = vunpack.c.0.s8 %v273
    %v275 = vlaneseq
    %v276 = vshrl.u32 %v275, 7
    %v277 = vsub.s32 %v274, %v276
    %v278 = vrot.slane %v250, %v277
    %v279 = vcombine.low %v257, %v264
    %v280 = vcombine.low %v271, %v278
    %v282 = vunpack.c.l.s4 1966171168
    %v283 = vunpack.c.0.s8 %v282
    %v284 = vlaneseq
    %v285 = vshrl.u32 %v284, 7
    %v286 = vsub.s32 %v283, %v285
    %v287 = vrot.slane %v279, %v286
    %v289 = vunpack.c.l.s4 1966171168
    %v290 = vunpack.c.0.s8 %v289
    %v291 = vlaneseq
    %v292 = vshrl.u32 %v291, 7
    %v293 = vsub.s32 %v290, %v292
    %v294 = vrot.slane %v280, %v293
    %v295 = vcombine.low %v287, %v294
    %v296 = vcombine.low %v203, %v209
    %v297 = vcombine.low %v215, %v221
    %v298 = vcombine.low %v227, %v233
    %v299 = vcombine.low %v239, %v245
    %v301 = vunpack.c.l.s4 1966171168
    %v302 = vunpack.c.0.s8 %v301
    %v303 = vlaneseq
    %v304 = vshrl.u32 %v303, 7
    %v305 = vsub.s32 %v302, %v304
    %v306 = vrot.slane %v296, %v305
    %v308 = vunpack.c.l.s4 1966171168
    %v309 = vunpack.c.0.s8 %v308
    %v310 = vlaneseq
    %v311 = vshrl.u32 %v310, 7
    %v312 = vsub.s32 %v309, %v311
    %v313 = vrot.slane %v297, %v312
    %v315 = vunpack.c.l.s4 1966171168
    %v316 = vunpack.c.0.s8 %v315
    %v317 = vlaneseq
    %v318 = vshrl.u32 %v317, 7
    %v319 = vsub.s32 %v316, %v318
    %v320 = vrot.slane %v298, %v319
    %v322 = vunpack.c.l.s4 1966171168
    %v323 = vunpack.c.0.s8 %v322
    %v324 = vlaneseq
    %v325 = vshrl.u32 %v324, 7
    %v326 = vsub.s32 %v323, %v325
    %v327 = vrot.slane %v299, %v326
    %v328 = vcombine.low %v306, %v313
    %v329 = vcombine.low %v320, %v327
    %v331 = vunpack.c.l.s4 1966171168
    %v332 = vunpack.c.0.s8 %v331
    %v333 = vlaneseq
    %v334 = vshrl.u32 %v333, 7
    %v335 = vsub.s32 %v332, %v334
    %v336 = vrot.slane %v328, %v335
    %v338 = vunpack.c.l.s4 1966171168
    %v339 = vunpack.c.0.s8 %v338
    %v340 = vlaneseq
    %v341 = vshrl.u32 %v340, 7
    %v342 = vsub.s32 %v339, %v341
    %v343 = vrot.slane %v329, %v342
    %v344 = vcombine.low %v336, %v343
    %vm345 = vcmask 1040384
    %vm346 = vsmask.f32 0
    %vm347 = vmand %vm345, %vm346
    %vm348 = vcmask 1041409
    %vm349 = vsmask.f32 1024
    %vm350 = vmand %vm348, %vm349
    %vm351 = vmor %vm350, %vm347
    %vm352 = vcmask 1042434
    %vm353 = vsmask.f32 2048
    %vm354 = vmand %vm352, %vm353
    %vm355 = vmor %vm354, %vm351
    %vm356 = vcmask 1043459
    %vm357 = vsmask.f32 3072
    %vm358 = vmand %vm356, %vm357
    %vm359 = vmor %vm358, %vm355
    %vm360 = vcmask 1044484
    %vm361 = vsmask.f32 4096
    %vm362 = vmand %vm360, %vm361
    %vm363 = vmor %vm362, %vm359
    %vm364 = vcmask 1045509
    %vm365 = vsmask.f32 5120
    %vm366 = vmand %vm364, %vm365
    %vm367 = vmor %vm366, %vm363
    %vm368 = vcmask 1046534
    %vm369 = vsmask.f32 6144
    %vm370 = vmand %vm368, %vm369
    %vm371 = vmor %vm370, %vm367
    %vm372 = vcmask 1047559
    %vm373 = vsmask.f32 7168
    %vm374 = vmand %vm372, %vm373
    %vm375 = vmor %vm374, %vm371
    %v376 = vld [vmem:[#allocation5] sm:$0xff]
    %v377 = vsel %vm375, %v295, %v376
    %378 = vst [vmem:[#allocation5] sm:$0xff] %v377
    %v379 = vld [vmem:[#allocation5 + $0x8] sm:$0xff]
    %v380 = vsel %vm375, %v344, %v379
    %381 = vst [vmem:[#allocation5 + $0x8] sm:$0xff] %v380
    // Predicated region
    $region10: #{tpu_custom_call.1} parent=1 // pred_check
      _
    $region11: #{tpu_custom_call.1} parent=1 // pred_check_branch
      %383 = sbr.rel (0) target = $region13
    $region12: #{tpu_custom_call.1} parent=1 // pred_region
      %s385 = ssub.s32 256, 256
      %386 = vsyncadd [#allocation4], %s385
      %s388 = sshll.u32 [#allocation5], 4
      %s389 = int_to_ptr.vmem [resolvable:$true] %s388
      %391 = dma.vmem_to_hbm [thread:$0]  %s389, 256, %s1, [#allocation4]
    $region13: #{tpu_custom_call.1} parent=1 // pred_fallthru
      _
    // Predicated region
    $region14: #{tpu_custom_call.1} parent=1 // pred_check
      _
    $region15: #{tpu_custom_call.1} parent=1 // pred_check_branch
      %393 = sbr.rel (0) target = $region17
    $region16: #{tpu_custom_call.1} parent=1 // pred_region
      %394 = dma.done [#allocation4], 256
    $region17: #{tpu_custom_call.1} parent=1 // pred_fallthru
      _
    %395 = vsyncpa [#allocation3], 1
    %396 = vsyncpa [#allocation4], 1

</llo_original>
